<compile_context>
chip_gen: v7x
topology: tpu7x:2x2x1
jax: 0.10.0
libtpu: 0.0.40
codegen_flags: <defaults>
</compile_context>

<pallas_src>
import functools

import jax
import jax.numpy as jnp
from jax import lax
from jax.experimental import pallas as pl
from jax.experimental.pallas import tpu as pltpu

EPS = 1e-5
LANE = 128                      # TPU lane width: channel dims padded to this
MATMUL_DTYPE = jnp.bfloat16     # MXU operand / activation-I/O dtype (f32 accum)


def _round_up(n, m):
    return (n + m - 1) // m * m


def _vmem_capacity_bytes():
    try:
        return int(pltpu.get_tpu_info().vmem_capacity_bytes)
    except Exception:
        return 64 << 20          # conservative default (v7x per-TC VMEM)


def _pick_batch_tile(B, L, rows_budget):
    """Largest divisor of B whose tile (tb*L rows) fits the budget and keeps the
    sublane (second-minor) block dim 8-aligned; fall back to a single tile."""
    cands = [tb for tb in range(1, B + 1)
             if B % tb == 0 and (tb * L) % 8 == 0 and tb * L <= rows_budget]
    return max(cands) if cands else B


def _cost(flops, bytes_accessed):
    return pl.CostEstimate(flops=int(flops), transcendentals=0,
                           bytes_accessed=int(bytes_accessed))


def _stats_rows(h):
    """Per-channel partial (sum, sumsq) of an f32 tile -> (2, C) block."""
    return jnp.concatenate([jnp.sum(h, axis=0, keepdims=True),
                            jnp.sum(h * h, axis=0, keepdims=True)], axis=0)


def _finalize_stats(st, gamma, beta, n):
    """Reduce per-tile partials -> per-channel BN scale/shift (f32 row vectors)."""
    s = jnp.sum(st[:, 0, :], axis=0)
    sq = jnp.sum(st[:, 1, :], axis=0)
    mean = s / n
    var = jnp.maximum(sq / n - mean * mean, 0.0)
    scale = lax.rsqrt(var + EPS) * gamma           # padded channels: gamma=0 -> 0
    shift = beta - mean * scale
    return (scale.reshape(1, -1).astype(jnp.float32),
            shift.reshape(1, -1).astype(jnp.float32))


# ----------------------------- kernels --------------------------------------

def conv_stats_kernel(x_ref, w_ref, h_ref, st_ref):
    """h = x @ w (bf16 x bf16 -> f32); emit bf16 h and per-tile (sum, sumsq)."""
    h = jnp.dot(x_ref[...], w_ref[...], preferred_element_type=jnp.float32)
    h_ref[...] = h.astype(h_ref.dtype)
    st_ref[0] = _stats_rows(h)


def bn_conv_stats_kernel(h_ref, sc_ref, sh_ref, w_ref, o_ref, st_ref):
    """BN(scale,shift)+ReLU in f32, then conv1x1 matmul; emit bf16 + stats."""
    hn = jnp.maximum(h_ref[...].astype(jnp.float32) * sc_ref[...] + sh_ref[...], 0.0)
    h = jnp.dot(hn.astype(w_ref.dtype), w_ref[...],
                preferred_element_type=jnp.float32)
    o_ref[...] = h.astype(o_ref.dtype)
    st_ref[0] = _stats_rows(h)


def bn_conv3tap_stats_kernel(h_ref, sc_ref, sh_ref, w_ref, o_ref, st_ref, *, TB, L):
    """BN+ReLU, then the k=3 / pad=1 conv as ONE fused K=3*Wp matmul.

    Taps are built in bf16 so the (TM, 3*Wp) slab is never materialized in f32.
    Tiles are whole batch elements, so zero padding at l=0 / l=L-1 is local.
    """
    Wp = h_ref.shape[-1]
    hn = jnp.maximum(h_ref[...].astype(jnp.float32) * sc_ref[...] + sh_ref[...], 0.0)
    hb = hn.astype(w_ref.dtype).reshape(TB, L, Wp)
    z = jnp.zeros((TB, 1, Wp), w_ref.dtype)
    prev = jnp.concatenate([z, hb[:, :L - 1, :]], axis=1)     # h[l-1]
    nxt = jnp.concatenate([hb[:, 1:, :], z], axis=1)          # h[l+1]
    taps = jnp.concatenate([prev, hb, nxt], axis=-1).reshape(TB * L, 3 * Wp)
    h2 = jnp.dot(taps, w_ref[...], preferred_element_type=jnp.float32)
    o_ref[...] = h2.astype(o_ref.dtype)
    st_ref[0] = _stats_rows(h2)


def bn_residual_relu_kernel(h_ref, x_ref, sc_ref, sh_ref, o_ref):
    """bn3 (no relu) + identity residual + final ReLU; lane-dense bf16 store."""
    hn = h_ref[...].astype(jnp.float32) * sc_ref[...] + sh_ref[...]
    o_ref[...] = jnp.maximum(hn + x_ref[...].astype(jnp.float32), 0.0).astype(o_ref.dtype)


# ----------------------------- wrapper ---------------------------------------

def bottleneck_forward(x_ncl, params, max_rows_per_tile=None):
    """x_ncl: (B, C, L) like torch Conv1d. Returns (B, C_out, L) float32."""
    B, Cin, L = x_ncl.shape
    W = params["w1"].shape[1]
    Cout = params["w3"].shape[1]
    assert Cin == Cout, "no-downsample Bottleneck requires inplanes == planes*expansion"

    Cin_p = _round_up(Cin, LANE)
    W_p = _round_up(W, LANE)
    Cout_p = _round_up(Cout, LANE)
    M = B * L

    # Per-generation VMEM budget / tile selection.
    vmem_cap = _vmem_capacity_bytes()
    vmem_limit = int(min(vmem_cap * 3 // 4, 112 << 20))   # ~48 MiB v7x, ~96 MiB v5e/v6e
    rows_budget = max(L, min(4096, vmem_limit // (40 * W_p)))
    if max_rows_per_tile is not None:
        rows_budget = min(rows_budget, max(L, max_rows_per_tile))
    TB = _pick_batch_tile(B, L, rows_budget)
    TM = TB * L
    G = B // TB

    cparams = pltpu.CompilerParams(dimension_semantics=("parallel",),
                                   vmem_limit_bytes=vmem_limit)

    # Activations: NCL -> channels-last -> collapse (B,L) -> lane pad -> bf16.
    # (single fused XLA pass under jit; bf16 halves x HBM traffic and also
    #  serves as the residual identity.)
    xb = jnp.pad(jnp.transpose(x_ncl, (0, 2, 1)).reshape(M, Cin),
                 ((0, 0), (0, Cin_p - Cin))).astype(MATMUL_DTYPE)

    # Weights: contraction-ready, zero-padded, bf16 for the MXU.
    w1 = jnp.pad(params["w1"], ((0, Cin_p - Cin), (0, W_p - W))).astype(MATMUL_DTYPE)
    w2f = jnp.pad(params["w2"], ((0, 0), (0, W_p - W), (0, W_p - W)))
    w2f = w2f.reshape(3 * W_p, W_p).astype(MATMUL_DTYPE)           # fused 3-tap weight
    w3 = jnp.pad(params["w3"], ((0, W_p - W), (0, Cout_p - Cout))).astype(MATMUL_DTYPE)

    # BN affine params (padded channels -> gamma=beta=0 -> stay exactly zero).
    g1 = jnp.pad(params["g1"], (0, W_p - W)); b1 = jnp.pad(params["b1"], (0, W_p - W))
    g2 = jnp.pad(params["g2"], (0, W_p - W)); b2 = jnp.pad(params["b2"], (0, W_p - W))
    g3 = jnp.pad(params["g3"], (0, Cout_p - Cout))
    b3 = jnp.pad(params["b3"], (0, Cout_p - Cout))

    n = float(M)

    # --- stage 1: conv1 (1x1) + global stats ---------------------------------
    h1, st1 = pl.pallas_call(
        conv_stats_kernel,
        out_shape=(jax.ShapeDtypeStruct((M, W_p), MATMUL_DTYPE),
                   jax.ShapeDtypeStruct((G, 2, W_p), jnp.float32)),
        grid=(G,),
        in_specs=[pl.BlockSpec((TM, Cin_p), lambda i: (i, 0)),
                  pl.BlockSpec((Cin_p, W_p), lambda i: (0, 0))],
        out_specs=(pl.BlockSpec((TM, W_p), lambda i: (i, 0)),
                   pl.BlockSpec((1, 2, W_p), lambda i: (i, 0, 0))),
        compiler_params=cparams,
        cost_estimate=_cost(2 * M * Cin_p * W_p,
                            2 * M * (Cin_p + W_p) + 2 * Cin_p * W_p),
    )(xb, w1)
    sc1, sh1 = _finalize_stats(st1, g1, b1, n)

    # --- stage 2: bn1+relu -> conv2 (k=3, fused taps) + global stats ---------
    h2, st2 = pl.pallas_call(
        functools.partial(bn_conv3tap_stats_kernel, TB=TB, L=L),
        out_shape=(jax.ShapeDtypeStruct((M, W_p), MATMUL_DTYPE),
                   jax.ShapeDtypeStruct((G, 2, W_p), jnp.float32)),
        grid=(G,),
        in_specs=[pl.BlockSpec((TM, W_p), lambda i: (i, 0)),
                  pl.BlockSpec((1, W_p), lambda i: (0, 0)),
                  pl.BlockSpec((1, W_p), lambda i: (0, 0)),
                  pl.BlockSpec((3 * W_p, W_p), lambda i: (0, 0))],
        out_specs=(pl.BlockSpec((TM, W_p), lambda i: (i, 0)),
                   pl.BlockSpec((1, 2, W_p), lambda i: (i, 0, 0))),
        compiler_params=cparams,
        cost_estimate=_cost(2 * M * 3 * W_p * W_p,
                            4 * M * W_p + 6 * W_p * W_p),
    )(h1, sc1, sh1, w2f)
    sc2, sh2 = _finalize_stats(st2, g2, b2, n)

    # --- stage 3: bn2+relu -> conv3 (1x1) + global stats ----------------------
    h3, st3 = pl.pallas_call(
        bn_conv_stats_kernel,
        out_shape=(jax.ShapeDtypeStruct((M, Cout_p), MATMUL_DTYPE),
                   jax.ShapeDtypeStruct((G, 2, Cout_p), jnp.float32)),
        grid=(G,),
        in_specs=[pl.BlockSpec((TM, W_p), lambda i: (i, 0)),
                  pl.BlockSpec((1, W_p), lambda i: (0, 0)),
                  pl.BlockSpec((1, W_p), lambda i: (0, 0)),
                  pl.BlockSpec((W_p, Cout_p), lambda i: (0, 0))],
        out_specs=(pl.BlockSpec((TM, Cout_p), lambda i: (i, 0)),
                   pl.BlockSpec((1, 2, Cout_p), lambda i: (i, 0, 0))),
        compiler_params=cparams,
        cost_estimate=_cost(2 * M * W_p * Cout_p,
                            2 * M * (W_p + Cout_p) + 2 * W_p * Cout_p),
    )(h2, sc2, sh2, w3)
    sc3, sh3 = _finalize_stats(st3, g3, b3, n)

    # --- stage 4: bn3 + identity residual + relu ------------------------------
    out = pl.pallas_call(
        bn_residual_relu_kernel,
        out_shape=jax.ShapeDtypeStruct((M, Cout_p), MATMUL_DTYPE),
        grid=(G,),
        in_specs=[pl.BlockSpec((TM, Cout_p), lambda i: (i, 0)),
                  pl.BlockSpec((TM, Cin_p), lambda i: (i, 0)),
                  pl.BlockSpec((1, Cout_p), lambda i: (0, 0)),
                  pl.BlockSpec((1, Cout_p), lambda i: (0, 0))],
        out_specs=pl.BlockSpec((TM, Cout_p), lambda i: (i, 0)),
        compiler_params=cparams,
        cost_estimate=_cost(4 * M * Cout_p, 6 * M * Cout_p),
    )(h3, xb, sc3, sh3)

    # Channels-last -> torch NCL layout (one fused XLA pass under jit).
    out = out[:, :Cout].reshape(B, L, Cout)
    return jnp.transpose(out, (0, 2, 1)).astype(jnp.float32)


bottleneck_forward_jit = jax.jit(bottleneck_forward,
                                 static_argnames=("max_rows_per_tile",))


# ----------------------------- pure-JAX reference ----------------------------

def bottleneck_reference(x_ncl, params):
    """Pure-JAX reference with the SAME precision policy (bf16 matmul operands
    and bf16 activation storage, f32 accumulation, f32 BN/ReLU)."""
    B, Cin, L = x_ncl.shape
    M = B * L
    f32 = jnp.float32
    xb = jnp.transpose(x_ncl, (0, 2, 1)).reshape(M, Cin).astype(MATMUL_DTYPE)

    def mm(a, w):
        return jnp.dot(a, w.astype(MATMUL_DTYPE), preferred_element_type=f32)

    def stats_scale_shift(h, gamma, beta):
        mean = jnp.mean(h, axis=0)
        var = jnp.maximum(jnp.mean(h * h, axis=0) - mean * mean, 0.0)
        scale = lax.rsqrt(var + EPS) * gamma
        shift = beta - mean * scale
        return scale.reshape(1, -1), shift.reshape(1, -1)

    # conv1 + bn1 + relu
    h1 = mm(xb, params["w1"])
    sc1, sh1 = stats_scale_shift(h1, params["g1"], params["b1"])
    h1n = jnp.maximum(h1.astype(MATMUL_DTYPE).astype(f32) * sc1 + sh1, 0.0)

    # conv2 (k=3, pad=1) + bn2 + relu
    W = h1.shape[-1]
    hb = h1n.astype(MATMUL_DTYPE).reshape(B, L, W)
    z = jnp.zeros((B, 1, W), MATMUL_DTYPE)
    prev = jnp.concatenate([z, hb[:, :L - 1]], axis=1).reshape(M, W)
    nxt = jnp.concatenate([hb[:, 1:], z], axis=1).reshape(M, W)
    ctr = hb.reshape(M, W)
    h2 = mm(prev, params["w2"][0]) + mm(ctr, params["w2"][1]) + mm(nxt, params["w2"][2])
    sc2, sh2 = stats_scale_shift(h2, params["g2"], params["b2"])
    h2n = jnp.maximum(h2.astype(MATMUL_DTYPE).astype(f32) * sc2 + sh2, 0.0)

    # conv3 + bn3 + residual + relu
    h3 = mm(h2n.astype(MATMUL_DTYPE), params["w3"])
    sc3, sh3 = stats_scale_shift(h3, params["g3"], params["b3"])
    out = jnp.maximum(h3.astype(MATMUL_DTYPE).astype(f32) * sc3 + sh3
                      + xb.astype(f32), 0.0)
    out = out.astype(MATMUL_DTYPE).astype(f32).reshape(B, L, -1)
    return jnp.transpose(out, (0, 2, 1))


def make_params(key, inplanes, planes, base_width=64, groups=1, expansion=4):
    width = int(planes * (base_width / 64.0)) * groups
    cout = planes * expansion
    ks = jax.random.split(key, 9)
    return {
        # conv weights stored contraction-ready: (Cin, Cout); conv2 as (tap, Cin, Cout)
        "w1": 0.1 * jax.random.normal(ks[0], (inplanes, width), jnp.float32),
        "w2": 0.1 * jax.random.normal(ks[1], (3, width, width), jnp.float32),
        "w3": 0.1 * jax.random.normal(ks[2], (width, cout), jnp.float32),
        # batchnorm affine params (gamma, beta)
        "g1": 1.0 + 0.1 * jax.random.normal(ks[3], (width,), jnp.float32),
        "b1": 0.1 * jax.random.normal(ks[4], (width,), jnp.float32),
        "g2": 1.0 + 0.1 * jax.random.normal(ks[5], (width,), jnp.float32),
        "b2": 0.1 * jax.random.normal(ks[6], (width,), jnp.float32),
        "g3": 1.0 + 0.1 * jax.random.normal(ks[7], (cout,), jnp.float32),
        "b3": 0.1 * jax.random.normal(ks[8], (cout,), jnp.float32),
    }


if __name__ == "__main__":
    key = jax.random.PRNGKey(0)
    k_x, k_p = jax.random.split(key)

    # Bottleneck(inplanes=16, planes=4): width=4, out channels = 4*4 = 16,
    # stride=1, downsample=None -> identity path is the raw input.
    B, C, L = 2, 16, 8
    x = jax.random.normal(k_x, (B, C, L), jnp.float32)
    params = make_params(k_p, inplanes=C, planes=4)

    ref = bottleneck_reference(x, params)

    # Default path (tile size chosen from VMEM budget; single tile here).
    out = jax.block_until_ready(bottleneck_forward_jit(x, params))
    assert out.shape == (B, C, L)
    assert jnp.allclose(out, ref, atol=2e-2, rtol=2e-2), "mismatch vs reference"

    # Forced multi-tile path: exercises the gridded pipeline and the cross-tile
    # global BN statistic merge (TB=1 -> one tile per batch element).
    out_t = jax.block_until_ready(bottleneck_forward_jit(x, params, max_rows_per_tile=L))
    assert jnp.allclose(out_t, ref, atol=2e-2, rtol=2e-2), "tiled mismatch vs reference"

    print("KERNEL_OK")
</pallas_src>

<mosaic_0001>
module attributes {stable_mosaic.version = 11 : i64} {
  func.func @conv_stats_kernel(%arg0: i32, %arg1: memref<16x128xbf16, #tpu.memory_space<vmem>>, %arg2: memref<128x128xbf16, #tpu.memory_space<vmem>>, %arg3: memref<16x128xbf16, #tpu.memory_space<vmem>>, %arg4: memref<1x2x128xf32, #tpu.memory_space<vmem>>) attributes {dimension_semantics = [#tpu.dimension_semantics<parallel>], iteration_bounds = array<i64: 1>, scalar_prefetch = 0 : i64, scratch_operands = 0 : i64, tpu.core_type = #tpu.core_type<tc>, window_params = [{transform_indices = @transform_0, window_bounds = array<i64: 16, 128>}, {pipeline_mode = #tpu.pipeline_mode<synchronous>, transform_indices = @transform_1, window_bounds = array<i64: 128, 128>}, {transform_indices = @transform_2, window_bounds = array<i64: 16, 128>}, {transform_indices = @transform_3, window_bounds = array<i64: 1, 2, 128>}]} {
    %c0 = arith.constant 0 : index
    %c0_0 = arith.constant 0 : index
    %0 = vector.load %arg1[%c0, %c0_0] : memref<16x128xbf16, #tpu.memory_space<vmem>>, vector<16x128xbf16>
    %c0_1 = arith.constant 0 : index
    %c0_2 = arith.constant 0 : index
    %1 = vector.load %arg2[%c0_1, %c0_2] : memref<128x128xbf16, #tpu.memory_space<vmem>>, vector<128x128xbf16>
    %cst = arith.constant dense<0.000000e+00> : vector<16x128xf32>
    %2 = tpu.matmul %0, %1, %cst {dimension_numbers = #tpu.dot_dimension_numbers<[1], [0], [0], [1], [0, 0, 1, 1], [], []>} : vector<16x128xbf16>, vector<128x128xbf16>, vector<16x128xf32> -> vector<16x128xf32>
    %3 = arith.truncf %2 : vector<16x128xf32> to vector<16x128xbf16>
    %c0_3 = arith.constant 0 : index
    %c0_4 = arith.constant 0 : index
    %4 = vector.load %arg3[%c0_3, %c0_4] : memref<16x128xbf16, #tpu.memory_space<vmem>>, vector<16x128xbf16>
    tpu.vector_store %arg3[%c0_3, %c0_4], %3 {strides = array<i32>} : memref<16x128xbf16, #tpu.memory_space<vmem>>, vector<16x128xbf16>,
    %cst_5 = arith.constant dense<0.000000e+00> : vector<128xf32>
    %5 = vector.multi_reduction <add>, %2, %cst_5 [0] : vector<16x128xf32> to vector<128xf32>
    %6 = vector.shape_cast %5 : vector<128xf32> to vector<1x128xf32>
    %7 = arith.mulf %2, %2 : vector<16x128xf32>
    %cst_6 = arith.constant dense<0.000000e+00> : vector<128xf32>
    %8 = vector.multi_reduction <add>, %7, %cst_6 [0] : vector<16x128xf32> to vector<128xf32>
    %9 = vector.shape_cast %8 : vector<128xf32> to vector<1x128xf32>
    %10 = tpu.concatenate %6, %9 in 0 : vector<1x128xf32>, vector<1x128xf32> -> vector<2x128xf32>
    %c0_7 = arith.constant 0 : index
    %c0_8 = arith.constant 0 : index
    %c0_9 = arith.constant 0 : index
    %11 = vector.load %arg4[%c0_7, %c0_8, %c0_9] : memref<1x2x128xf32, #tpu.memory_space<vmem>>, vector<1x2x128xf32>
    %12 = vector.shape_cast %11 : vector<1x2x128xf32> to vector<2x128xf32>
    %13 = vector.shape_cast %10 : vector<2x128xf32> to vector<1x2x128xf32>
    tpu.vector_store %arg4[%c0_7, %c0_8, %c0_9], %13 {strides = array<i32>} : memref<1x2x128xf32, #tpu.memory_space<vmem>>, vector<1x2x128xf32>,
    return
  }
  func.func @transform_0(%arg0: i32) -> (i32, i32) {
    %c0_i32 = arith.constant 0 : i32
    %c0_i32_0 = arith.constant 0 : i32
    return %arg0, %c0_i32 : i32, i32
  }
  func.func @transform_1(%arg0: i32) -> (i32, i32) {
    %c0_i32 = arith.constant 0 : i32
    %c0_i32_0 = arith.constant 0 : i32
    %c0_i32_1 = arith.constant 0 : i32
    return %c0_i32, %c0_i32_0 : i32, i32
  }
  func.func @transform_2(%arg0: i32) -> (i32, i32) {
    %c0_i32 = arith.constant 0 : i32
    %c0_i32_0 = arith.constant 0 : i32
    return %arg0, %c0_i32 : i32, i32
  }
  func.func @transform_3(%arg0: i32) -> (i32, i32, i32) {
    %c0_i32 = arith.constant 0 : i32
    %c0_i32_0 = arith.constant 0 : i32
    %c0_i32_1 = arith.constant 0 : i32
    return %arg0, %c0_i32, %c0_i32_0 : i32, i32, i32
  }
}

module attributes {stable_mosaic.version = 11 : i64} {
  func.func @bn_conv3tap_stats_kernel(%arg0: i32, %arg1: memref<16x128xbf16, #tpu.memory_space<vmem>>, %arg2: memref<1x128xf32, #tpu.memory_space<vmem>>, %arg3: memref<1x128xf32, #tpu.memory_space<vmem>>, %arg4: memref<384x128xbf16, #tpu.memory_space<vmem>>, %arg5: memref<16x128xbf16, #tpu.memory_space<vmem>>, %arg6: memref<1x2x128xf32, #tpu.memory_space<vmem>>) attributes {dimension_semantics = [#tpu.dimension_semantics<parallel>], iteration_bounds = array<i64: 1>, scalar_prefetch = 0 : i64, scratch_operands = 0 : i64, tpu.core_type = #tpu.core_type<tc>, window_params = [{transform_indices = @transform_0, window_bounds = array<i64: 16, 128>}, {pipeline_mode = #tpu.pipeline_mode<synchronous>, transform_indices = @transform_1, window_bounds = array<i64: 1, 128>}, {pipeline_mode = #tpu.pipeline_mode<synchronous>, transform_indices = @transform_2, window_bounds = array<i64: 1, 128>}, {pipeline_mode = #tpu.pipeline_mode<synchronous>, transform_indices = @transform_3, window_bounds = array<i64: 384, 128>}, {transform_indices = @transform_4, window_bounds = array<i64: 16, 128>}, {transform_indices = @transform_5, window_bounds = array<i64: 1, 2, 128>}]} {
    %c0 = arith.constant 0 : index
    %c0_0 = arith.constant 0 : index
    %0 = vector.load %arg1[%c0, %c0_0] : memref<16x128xbf16, #tpu.memory_space<vmem>>, vector<16x128xbf16>
    %1 = arith.extf %0 : vector<16x128xbf16> to vector<16x128xf32>
    %c0_1 = arith.constant 0 : index
    %c0_2 = arith.constant 0 : index
    %2 = vector.load %arg2[%c0_1, %c0_2] : memref<1x128xf32, #tpu.memory_space<vmem>>, vector<1x128xf32>
    %3 = vector.broadcast %2 : vector<1x128xf32> to vector<16x128xf32>
    %4 = arith.mulf %1, %3 : vector<16x128xf32>
    %c0_3 = arith.constant 0 : index
    %c0_4 = arith.constant 0 : index
    %5 = vector.load %arg3[%c0_3, %c0_4] : memref<1x128xf32, #tpu.memory_space<vmem>>, vector<1x128xf32>
    %6 = vector.broadcast %5 : vector<1x128xf32> to vector<16x128xf32>
    %7 = arith.addf %4, %6 : vector<16x128xf32>
    %cst = arith.constant 0.000000e+00 : f32
    %8 = vector.broadcast %cst : f32 to vector<16x128xf32>
    %9 = arith.maximumf %7, %8 : vector<16x128xf32>
    %10 = arith.truncf %9 : vector<16x128xf32> to vector<16x128xbf16>
    %11 = vector.shape_cast %10 : vector<16x128xbf16> to vector<2x8x128xbf16>
    %cst_5 = arith.constant 0.000000e+00 : bf16
    %12 = vector.broadcast %cst_5 : bf16 to vector<2x1x128xbf16>
    %13 = vector.extract_strided_slice %11 {offsets = [0, 0, 0], sizes = [2, 7, 128], strides = [1, 1, 1]} : vector<2x8x128xbf16> to vector<2x7x128xbf16>
    %14 = tpu.concatenate %12, %13 in 1 : vector<2x1x128xbf16>, vector<2x7x128xbf16> -> vector<2x8x128xbf16>
    %15 = vector.extract_strided_slice %11 {offsets = [0, 1, 0], sizes = [2, 7, 128], strides = [1, 1, 1]} : vector<2x8x128xbf16> to vector<2x7x128xbf16>
    %16 = tpu.concatenate %15, %12 in 1 : vector<2x7x128xbf16>, vector<2x1x128xbf16> -> vector<2x8x128xbf16>
    %17 = tpu.concatenate %14, %11, %16 in 2 : vector<2x8x128xbf16>, vector<2x8x128xbf16>, vector<2x8x128xbf16> -> vector<2x8x384xbf16>
    %18 = vector.shape_cast %17 : vector<2x8x384xbf16> to vector<16x384xbf16>
    %c0_6 = arith.constant 0 : index
    %c0_7 = arith.constant 0 : index
    %19 = vector.load %arg4[%c0_6, %c0_7] : memref<384x128xbf16, #tpu.memory_space<vmem>>, vector<384x128xbf16>
    %cst_8 = arith.constant dense<0.000000e+00> : vector<16x128xf32>
    %20 = tpu.matmul %18, %19, %cst_8 {dimension_numbers = #tpu.dot_dimension_numbers<[1], [0], [0], [1], [0, 0, 1, 1], [], []>} : vector<16x384xbf16>, vector<384x128xbf16>, vector<16x128xf32> -> vector<16x128xf32>
    %21 = arith.truncf %20 : vector<16x128xf32> to vector<16x128xbf16>
    %c0_9 = arith.constant 0 : index
    %c0_10 = arith.constant 0 : index
    %22 = vector.load %arg5[%c0_9, %c0_10] : memref<16x128xbf16, #tpu.memory_space<vmem>>, vector<16x128xbf16>
    tpu.vector_store %arg5[%c0_9, %c0_10], %21 {strides = array<i32>} : memref<16x128xbf16, #tpu.memory_space<vmem>>, vector<16x128xbf16>,
    %cst_11 = arith.constant dense<0.000000e+00> : vector<128xf32>
    %23 = vector.multi_reduction <add>, %20, %cst_11 [0] : vector<16x128xf32> to vector<128xf32>
    %24 = vector.shape_cast %23 : vector<128xf32> to vector<1x128xf32>
    %25 = arith.mulf %20, %20 : vector<16x128xf32>
    %cst_12 = arith.constant dense<0.000000e+00> : vector<128xf32>
    %26 = vector.multi_reduction <add>, %25, %cst_12 [0] : vector<16x128xf32> to vector<128xf32>
    %27 = vector.shape_cast %26 : vector<128xf32> to vector<1x128xf32>
    %28 = tpu.concatenate %24, %27 in 0 : vector<1x128xf32>, vector<1x128xf32> -> vector<2x128xf32>
    %c0_13 = arith.constant 0 : index
    %c0_14 = arith.constant 0 : index
    %c0_15 = arith.constant 0 : index
    %29 = vector.load %arg6[%c0_13, %c0_14, %c0_15] : memref<1x2x128xf32, #tpu.memory_space<vmem>>, vector<1x2x128xf32>
    %30 = vector.shape_cast %29 : vector<1x2x128xf32> to vector<2x128xf32>
    %31 = vector.shape_cast %28 : vector<2x128xf32> to vector<1x2x128xf32>
    tpu.vector_store %arg6[%c0_13, %c0_14, %c0_15], %31 {strides = array<i32>} : memref<1x2x128xf32, #tpu.memory_space<vmem>>, vector<1x2x128xf32>,
    return
  }
  func.func @transform_0(%arg0: i32) -> (i32, i32) {
    %c0_i32 = arith.constant 0 : i32
    %c0_i32_0 = arith.constant 0 : i32
    return %arg0, %c0_i32 : i32, i32
  }
  func.func @transform_1(%arg0: i32) -> (i32, i32) {
    %c0_i32 = arith.constant 0 : i32
    %c0_i32_0 = arith.constant 0 : i32
    %c0_i32_1 = arith.constant 0 : i32
    return %c0_i32, %c0_i32_0 : i32, i32
  }
  func.func @transform_2(%arg0: i32) -> (i32, i32) {
    %c0_i32 = arith.constant 0 : i32
    %c0_i32_0 = arith.constant 0 : i32
    %c0_i32_1 = arith.constant 0 : i32
    return %c0_i32, %c0_i32_0 : i32, i32
  }
  func.func @transform_3(%arg0: i32) -> (i32, i32) {
    %c0_i32 = arith.constant 0 : i32
    %c0_i32_0 = arith.constant 0 : i32
    %c0_i32_1 = arith.constant 0 : i32
    return %c0_i32, %c0_i32_0 : i32, i32
  }
  func.func @transform_4(%arg0: i32) -> (i32, i32) {
    %c0_i32 = arith.constant 0 : i32
    %c0_i32_0 = arith.constant 0 : i32
    return %arg0, %c0_i32 : i32, i32
  }
  func.func @transform_5(%arg0: i32) -> (i32, i32, i32) {
    %c0_i32 = arith.constant 0 : i32
    %c0_i32_0 = arith.constant 0 : i32
    %c0_i32_1 = arith.constant 0 : i32
    return %arg0, %c0_i32, %c0_i32_0 : i32, i32, i32
  }
}

module attributes {stable_mosaic.version = 11 : i64} {
  func.func @bn_conv_stats_kernel(%arg0: i32, %arg1: memref<16x128xbf16, #tpu.memory_space<vmem>>, %arg2: memref<1x128xf32, #tpu.memory_space<vmem>>, %arg3: memref<1x128xf32, #tpu.memory_space<vmem>>, %arg4: memref<128x128xbf16, #tpu.memory_space<vmem>>, %arg5: memref<16x128xbf16, #tpu.memory_space<vmem>>, %arg6: memref<1x2x128xf32, #tpu.memory_space<vmem>>) attributes {dimension_semantics = [#tpu.dimension_semantics<parallel>], iteration_bounds = array<i64: 1>, scalar_prefetch = 0 : i64, scratch_operands = 0 : i64, tpu.core_type = #tpu.core_type<tc>, window_params = [{transform_indices = @transform_0, window_bounds = array<i64: 16, 128>}, {pipeline_mode = #tpu.pipeline_mode<synchronous>, transform_indices = @transform_1, window_bounds = array<i64: 1, 128>}, {pipeline_mode = #tpu.pipeline_mode<synchronous>, transform_indices = @transform_2, window_bounds = array<i64: 1, 128>}, {pipeline_mode = #tpu.pipeline_mode<synchronous>, transform_indices = @transform_3, window_bounds = array<i64: 128, 128>}, {transform_indices = @transform_4, window_bounds = array<i64: 16, 128>}, {transform_indices = @transform_5, window_bounds = array<i64: 1, 2, 128>}]} {
    %c0 = arith.constant 0 : index
    %c0_0 = arith.constant 0 : index
    %0 = vector.load %arg1[%c0, %c0_0] : memref<16x128xbf16, #tpu.memory_space<vmem>>, vector<16x128xbf16>
    %1 = arith.extf %0 : vector<16x128xbf16> to vector<16x128xf32>
    %c0_1 = arith.constant 0 : index
    %c0_2 = arith.constant 0 : index
    %2 = vector.load %arg2[%c0_1, %c0_2] : memref<1x128xf32, #tpu.memory_space<vmem>>, vector<1x128xf32>
    %3 = vector.broadcast %2 : vector<1x128xf32> to vector<16x128xf32>
    %4 = arith.mulf %1, %3 : vector<16x128xf32>
    %c0_3 = arith.constant 0 : index
    %c0_4 = arith.constant 0 : index
    %5 = vector.load %arg3[%c0_3, %c0_4] : memref<1x128xf32, #tpu.memory_space<vmem>>, vector<1x128xf32>
    %6 = vector.broadcast %5 : vector<1x128xf32> to vector<16x128xf32>
    %7 = arith.addf %4, %6 : vector<16x128xf32>
    %cst = arith.constant 0.000000e+00 : f32
    %8 = vector.broadcast %cst : f32 to vector<16x128xf32>
    %9 = arith.maximumf %7, %8 : vector<16x128xf32>
    %10 = arith.truncf %9 : vector<16x128xf32> to vector<16x128xbf16>
    %c0_5 = arith.constant 0 : index
    %c0_6 = arith.constant 0 : index
    %11 = vector.load %arg4[%c0_5, %c0_6] : memref<128x128xbf16, #tpu.memory_space<vmem>>, vector<128x128xbf16>
    %cst_7 = arith.constant dense<0.000000e+00> : vector<16x128xf32>
    %12 = tpu.matmul %10, %11, %cst_7 {dimension_numbers = #tpu.dot_dimension_numbers<[1], [0], [0], [1], [0, 0, 1, 1], [], []>} : vector<16x128xbf16>, vector<128x128xbf16>, vector<16x128xf32> -> vector<16x128xf32>
    %13 = arith.truncf %12 : vector<16x128xf32> to vector<16x128xbf16>
    %c0_8 = arith.constant 0 : index
    %c0_9 = arith.constant 0 : index
    %14 = vector.load %arg5[%c0_8, %c0_9] : memref<16x128xbf16, #tpu.memory_space<vmem>>, vector<16x128xbf16>
    tpu.vector_store %arg5[%c0_8, %c0_9], %13 {strides = array<i32>} : memref<16x128xbf16, #tpu.memory_space<vmem>>, vector<16x128xbf16>,
    %cst_10 = arith.constant dense<0.000000e+00> : vector<128xf32>
    %15 = vector.multi_reduction <add>, %12, %cst_10 [0] : vector<16x128xf32> to vector<128xf32>
    %16 = vector.shape_cast %15 : vector<128xf32> to vector<1x128xf32>
    %17 = arith.mulf %12, %12 : vector<16x128xf32>
    %cst_11 = arith.constant dense<0.000000e+00> : vector<128xf32>
    %18 = vector.multi_reduction <add>, %17, %cst_11 [0] : vector<16x128xf32> to vector<128xf32>
    %19 = vector.shape_cast %18 : vector<128xf32> to vector<1x128xf32>
    %20 = tpu.concatenate %16, %19 in 0 : vector<1x128xf32>, vector<1x128xf32> -> vector<2x128xf32>
    %c0_12 = arith.constant 0 : index
    %c0_13 = arith.constant 0 : index
    %c0_14 = arith.constant 0 : index
    %21 = vector.load %arg6[%c0_12, %c0_13, %c0_14] : memref<1x2x128xf32, #tpu.memory_space<vmem>>, vector<1x2x128xf32>
    %22 = vector.shape_cast %21 : vector<1x2x128xf32> to vector<2x128xf32>
    %23 = vector.shape_cast %20 : vector<2x128xf32> to vector<1x2x128xf32>
    tpu.vector_store %arg6[%c0_12, %c0_13, %c0_14], %23 {strides = array<i32>} : memref<1x2x128xf32, #tpu.memory_space<vmem>>, vector<1x2x128xf32>,
    return
  }
  func.func @transform_0(%arg0: i32) -> (i32, i32) {
    %c0_i32 = arith.constant 0 : i32
    %c0_i32_0 = arith.constant 0 : i32
    return %arg0, %c0_i32 : i32, i32
  }
  func.func @transform_1(%arg0: i32) -> (i32, i32) {
    %c0_i32 = arith.constant 0 : i32
    %c0_i32_0 = arith.constant 0 : i32
    %c0_i32_1 = arith.constant 0 : i32
    return %c0_i32, %c0_i32_0 : i32, i32
  }
  func.func @transform_2(%arg0: i32) -> (i32, i32) {
    %c0_i32 = arith.constant 0 : i32
    %c0_i32_0 = arith.constant 0 : i32
    %c0_i32_1 = arith.constant 0 : i32
    return %c0_i32, %c0_i32_0 : i32, i32
  }
  func.func @transform_3(%arg0: i32) -> (i32, i32) {
    %c0_i32 = arith.constant 0 : i32
    %c0_i32_0 = arith.constant 0 : i32
    %c0_i32_1 = arith.constant 0 : i32
    return %c0_i32, %c0_i32_0 : i32, i32
  }
  func.func @transform_4(%arg0: i32) -> (i32, i32) {
    %c0_i32 = arith.constant 0 : i32
    %c0_i32_0 = arith.constant 0 : i32
    return %arg0, %c0_i32 : i32, i32
  }
  func.func @transform_5(%arg0: i32) -> (i32, i32, i32) {
    %c0_i32 = arith.constant 0 : i32
    %c0_i32_0 = arith.constant 0 : i32
    %c0_i32_1 = arith.constant 0 : i32
    return %arg0, %c0_i32, %c0_i32_0 : i32, i32, i32
  }
}

module attributes {stable_mosaic.version = 11 : i64} {
  func.func @bn_residual_relu_kernel(%arg0: i32, %arg1: memref<16x128xbf16, #tpu.memory_space<vmem>>, %arg2: memref<16x128xbf16, #tpu.memory_space<vmem>>, %arg3: memref<1x128xf32, #tpu.memory_space<vmem>>, %arg4: memref<1x128xf32, #tpu.memory_space<vmem>>, %arg5: memref<16x128xbf16, #tpu.memory_space<vmem>>) attributes {dimension_semantics = [#tpu.dimension_semantics<parallel>], iteration_bounds = array<i64: 1>, scalar_prefetch = 0 : i64, scratch_operands = 0 : i64, tpu.core_type = #tpu.core_type<tc>, window_params = [{transform_indices = @transform_0, window_bounds = array<i64: 16, 128>}, {transform_indices = @transform_1, window_bounds = array<i64: 16, 128>}, {pipeline_mode = #tpu.pipeline_mode<synchronous>, transform_indices = @transform_2, window_bounds = array<i64: 1, 128>}, {pipeline_mode = #tpu.pipeline_mode<synchronous>, transform_indices = @transform_3, window_bounds = array<i64: 1, 128>}, {transform_indices = @transform_4, window_bounds = array<i64: 16, 128>}]} {
    %c0 = arith.constant 0 : index
    %c0_0 = arith.constant 0 : index
    %0 = vector.load %arg1[%c0, %c0_0] : memref<16x128xbf16, #tpu.memory_space<vmem>>, vector<16x128xbf16>
    %1 = arith.extf %0 : vector<16x128xbf16> to vector<16x128xf32>
    %c0_1 = arith.constant 0 : index
    %c0_2 = arith.constant 0 : index
    %2 = vector.load %arg3[%c0_1, %c0_2] : memref<1x128xf32, #tpu.memory_space<vmem>>, vector<1x128xf32>
    %3 = vector.broadcast %2 : vector<1x128xf32> to vector<16x128xf32>
    %4 = arith.mulf %1, %3 : vector<16x128xf32>
    %c0_3 = arith.constant 0 : index
    %c0_4 = arith.constant 0 : index
    %5 = vector.load %arg4[%c0_3, %c0_4] : memref<1x128xf32, #tpu.memory_space<vmem>>, vector<1x128xf32>
    %6 = vector.broadcast %5 : vector<1x128xf32> to vector<16x128xf32>
    %7 = arith.addf %4, %6 : vector<16x128xf32>
    %c0_5 = arith.constant 0 : index
    %c0_6 = arith.constant 0 : index
    %8 = vector.load %arg2[%c0_5, %c0_6] : memref<16x128xbf16, #tpu.memory_space<vmem>>, vector<16x128xbf16>
    %9 = arith.extf %8 : vector<16x128xbf16> to vector<16x128xf32>
    %10 = arith.addf %7, %9 : vector<16x128xf32>
    %cst = arith.constant 0.000000e+00 : f32
    %11 = vector.broadcast %cst : f32 to vector<16x128xf32>
    %12 = arith.maximumf %10, %11 : vector<16x128xf32>
    %13 = arith.truncf %12 : vector<16x128xf32> to vector<16x128xbf16>
    %c0_7 = arith.constant 0 : index
    %c0_8 = arith.constant 0 : index
    %14 = vector.load %arg5[%c0_7, %c0_8] : memref<16x128xbf16, #tpu.memory_space<vmem>>, vector<16x128xbf16>
    tpu.vector_store %arg5[%c0_7, %c0_8], %13 {strides = array<i32>} : memref<16x128xbf16, #tpu.memory_space<vmem>>, vector<16x128xbf16>,
    return
  }
  func.func @transform_0(%arg0: i32) -> (i32, i32) {
    %c0_i32 = arith.constant 0 : i32
    %c0_i32_0 = arith.constant 0 : i32
    return %arg0, %c0_i32 : i32, i32
  }
  func.func @transform_1(%arg0: i32) -> (i32, i32) {
    %c0_i32 = arith.constant 0 : i32
    %c0_i32_0 = arith.constant 0 : i32
    return %arg0, %c0_i32 : i32, i32
  }
  func.func @transform_2(%arg0: i32) -> (i32, i32) {
    %c0_i32 = arith.constant 0 : i32
    %c0_i32_0 = arith.constant 0 : i32
    %c0_i32_1 = arith.constant 0 : i32
    return %c0_i32, %c0_i32_0 : i32, i32
  }
  func.func @transform_3(%arg0: i32) -> (i32, i32) {
    %c0_i32 = arith.constant 0 : i32
    %c0_i32_0 = arith.constant 0 : i32
    %c0_i32_1 = arith.constant 0 : i32
    return %c0_i32, %c0_i32_0 : i32, i32
  }
  func.func @transform_4(%arg0: i32) -> (i32, i32) {
    %c0_i32 = arith.constant 0 : i32
    %c0_i32_0 = arith.constant 0 : i32
    return %arg0, %c0_i32 : i32, i32
  }
}

</mosaic_0001>

<llo_original>
// kernel: bottleneck_forward.7
$region0: #{bottleneck_forward.7}
  #allocation0 [shape = 'u32[]', space=smem, size = 0x4, offset = 0x4, fixed_abs, tag = 'smem constant byte address 0x4 - core index']
  #allocation1 [shape = 'u32[144,128]{1,0:T(1,128)}', space=vmem, size = 0x12000, scoped, tag = 'internal scratch']
  %s0 = inlined_call_operand.vmem [shape: bf16[16,128], index: 0, kind: input, shape index: {}]
  %s1 = inlined_call_operand.vmem [shape: bf16[16,128], index: 1, kind: input, shape index: {}]
  %s2 = inlined_call_operand.vmem [shape: f32[1,128], index: 2, kind: input, shape index: {}]
  %s3 = inlined_call_operand.vmem [shape: f32[1,128], index: 3, kind: input, shape index: {}]
  %s4 = inlined_call_operand.vmem [shape: bf16[16,128], index: 4, kind: output, shape index: {}]
  %s5 = sld [smem:[#allocation0]]
  $region26: #{bottleneck_forward.7} parent=0
    _
  %s7 = ssub.s32 1, %s5
  %s8 = scalar_select 0, %s7, %s5
  // Predicated region
  $region2: #{bottleneck_forward.7} parent=0 // pred_check
    _
  $region3: #{bottleneck_forward.7} parent=0 // pred_check_branch
    %10 = sbr.rel (0) target = $region5
  $region4: #{bottleneck_forward.7} parent=0 // pred_region
    _
  $region5: #{bottleneck_forward.7} parent=0 // pred_fallthru
    _
  // Predicated region
  $region6: #{bottleneck_forward.7} parent=0 // pred_check
    _
  $region7: #{bottleneck_forward.7} parent=0 // pred_check_branch
    %12 = sbr.rel (0) target = $region9
  $region8: #{bottleneck_forward.7} parent=0 // pred_region
    _
  $region9: #{bottleneck_forward.7} parent=0 // pred_fallthru
    _
  // Predicated region
  $region10: #{bottleneck_forward.7} parent=0 // pred_check
    _
  $region11: #{bottleneck_forward.7} parent=0 // pred_check_branch
    %14 = sbr.rel (0) target = $region13
  $region12: #{bottleneck_forward.7} parent=0 // pred_region
    _
  $region13: #{bottleneck_forward.7} parent=0 // pred_fallthru
    _
  // Predicated region
  $region14: #{bottleneck_forward.7} parent=0 // pred_check
    _
  $region15: #{bottleneck_forward.7} parent=0 // pred_check_branch
    %16 = sbr.rel (0) target = $region17
  $region16: #{bottleneck_forward.7} parent=0 // pred_region
    _
  $region17: #{bottleneck_forward.7} parent=0 // pred_fallthru
    _
  %v17 = vld [vmem:[%s0] sm:$0xf]
  %v18 = vld [vmem:[%s0 + $0x4] sm:$0xf]
  %v19 = vunpack.c.l.bf16 %v17
  %v20 = vunpack.c.l.bf16 %v18
  %v21 = vld [vmem:[%s2] sm:$0x1]
  %v23 = vlaneseq
  %v24 = vshrl.u32 %v23, 7
  %v25 = vsub.s32 0, %v24
  %v26 = vrot.slane %v21, %v25
  %v28 = vmul.f32 %v19, %v26
  %v29 = vmul.f32 %v20, %v26
  %v30 = vld [vmem:[%s3] sm:$0x1]
  %v32 = vlaneseq
  %v33 = vshrl.u32 %v32, 7
  %v34 = vsub.s32 0, %v33
  %v35 = vrot.slane %v30, %v34
  %v37 = vadd.f32 %v28, %v35
  %v38 = vadd.f32 %v29, %v35
  %v39 = vld [vmem:[%s1] sm:$0xf]
  %v40 = vld [vmem:[%s1 + $0x4] sm:$0xf]
  %v41 = vunpack.c.l.bf16 %v39
  %v42 = vunpack.c.l.bf16 %v40
  %v43 = vadd.f32 %v37, %v41
  %v44 = vadd.f32 %v38, %v42
  %v45 = vmax.f32 %v43, 0.0
  %v46 = vmax.f32 %v44, 0.0
  %v47 = vpack.c.bf16 %v46, %v45
  %v49 = vunpack.c.l.b16 %v47
  %v50 = vunpack.c.h.b16 %v47
  %v51 = vpack.c.b16 %v49, %v49
  %v52 = vpack.c.b16 %v50, %v50
  %55 = vst [vmem:[%s4] sm:$0xf] %v51
  %56 = vst [vmem:[%s4 + $0x4] sm:$0xf] %v52
  // Predicated region
  $region18: #{bottleneck_forward.7} parent=0 // pred_check
    _
  $region19: #{bottleneck_forward.7} parent=0 // pred_check_branch
    %58 = sbr.rel (0) target = $region21
  $region20: #{bottleneck_forward.7} parent=0 // pred_region
    _
  $region21: #{bottleneck_forward.7} parent=0 // pred_fallthru
    _
  // Predicated region
  $region22: #{bottleneck_forward.7} parent=0 // pred_check
    _
  $region23: #{bottleneck_forward.7} parent=0 // pred_check_branch
    %60 = sbr.rel (0) target = $region25
  $region24: #{bottleneck_forward.7} parent=0 // pred_region
    _
  $region25: #{bottleneck_forward.7} parent=0 // pred_fallthru
    _

// kernel: bottleneck_forward.4
$region0: #{bottleneck_forward.4}
  #allocation0 [shape = 'u32[]', space=smem, size = 0x4, offset = 0x4, fixed_abs, tag = 'smem constant byte address 0x4 - core index']
  #allocation1 [shape = 'u32[144,128]{1,0:T(1,128)}', space=vmem, size = 0x12000, scoped, tag = 'internal scratch']
  %s0 = inlined_call_operand.vmem [shape: bf16[16,128], index: 0, kind: input, shape index: {}]
  %s1 = inlined_call_operand.vmem [shape: bf16[128,128], index: 1, kind: input, shape index: {}]
  %s2 = inlined_call_operand.vmem [shape: bf16[16,128], index: 2, kind: output, shape index: {0}]
  %s3 = inlined_call_operand.vmem [shape: f32[1,2,128], index: 3, kind: output, shape index: {1}]
  %4 = xla_tuple %s2, %s3
  %s5 = sld [smem:[#allocation0]]
  $region26: #{bottleneck_forward.4} parent=0
    _
  %s7 = ssub.s32 1, %s5
  %s8 = scalar_select 0, %s7, %s5
  // Predicated region
  $region2: #{bottleneck_forward.4} parent=0 // pred_check
    _
  $region3: #{bottleneck_forward.4} parent=0 // pred_check_branch
    %10 = sbr.rel (0) target = $region5
  $region4: #{bottleneck_forward.4} parent=0 // pred_region
    _
  $region5: #{bottleneck_forward.4} parent=0 // pred_fallthru
    _
  // Predicated region
  $region6: #{bottleneck_forward.4} parent=0 // pred_check
    _
  $region7: #{bottleneck_forward.4} parent=0 // pred_check_branch
    %12 = sbr.rel (0) target = $region9
  $region8: #{bottleneck_forward.4} parent=0 // pred_region
    _
  $region9: #{bottleneck_forward.4} parent=0 // pred_fallthru
    _
  %v14 = vld [vmem:[%s0] sm:$0xf]
  %v15 = vld [vmem:[%s0 + $0x4] sm:$0xf]
  %v16 = vld [vmem:[%s1] sm:$0xf]
  %v17 = vld [vmem:[%s1 + $0x4] sm:$0xf]
  %v18 = vld [vmem:[%s1 + $0x8] sm:$0xf]
  %v19 = vld [vmem:[%s1 + $0xc] sm:$0xf]
  %v20 = vld [vmem:[%s1 + $0x10] sm:$0xf]
  %v21 = vld [vmem:[%s1 + $0x14] sm:$0xf]
  %v22 = vld [vmem:[%s1 + $0x18] sm:$0xf]
  %v23 = vld [vmem:[%s1 + $0x1c] sm:$0xf]
  %v24 = vld [vmem:[%s1 + $0x20] sm:$0xf]
  %v25 = vld [vmem:[%s1 + $0x24] sm:$0xf]
  %v26 = vld [vmem:[%s1 + $0x28] sm:$0xf]
  %v27 = vld [vmem:[%s1 + $0x2c] sm:$0xf]
  %v28 = vld [vmem:[%s1 + $0x30] sm:$0xf]
  %v29 = vld [vmem:[%s1 + $0x34] sm:$0xf]
  %v30 = vld [vmem:[%s1 + $0x38] sm:$0xf]
  %v31 = vld [vmem:[%s1 + $0x3c] sm:$0xf]
  %v34 = vunpack.c.l.b16 %v14
  %v35 = vunpack.c.l.b16 %v15
  %v36 = vpack.c.b16 %v35, %v34
  %v54 = vunpack.c.l.b16 %v16
  %v55 = vunpack.c.l.b16 %v17
  %v56 = vunpack.c.l.b16 %v18
  %v57 = vunpack.c.l.b16 %v19
  %v58 = vunpack.c.l.b16 %v20
  %v59 = vunpack.c.l.b16 %v21
  %v60 = vunpack.c.l.b16 %v22
  %v61 = vunpack.c.l.b16 %v23
  %v62 = vunpack.c.l.b16 %v24
  %v63 = vunpack.c.l.b16 %v25
  %v64 = vunpack.c.l.b16 %v26
  %v65 = vunpack.c.l.b16 %v27
  %v66 = vunpack.c.l.b16 %v28
  %v67 = vunpack.c.l.b16 %v29
  %v68 = vunpack.c.l.b16 %v30
  %v69 = vunpack.c.l.b16 %v31
  %v70 = vpack.c.b16 %v55, %v54
  %v71 = vpack.c.b16 %v57, %v56
  %v72 = vpack.c.b16 %v59, %v58
  %v73 = vpack.c.b16 %v61, %v60
  %v74 = vpack.c.b16 %v63, %v62
  %v75 = vpack.c.b16 %v65, %v64
  %v76 = vpack.c.b16 %v67, %v66
  %v77 = vpack.c.b16 %v69, %v68
  %86 = vmatprep.subr.bf16.mxu0 0
  %87 = vmatpush1.bf16.msra.mxu0 %v70
  %88 = vmatprep.subr.bf16.mxu0 0
  %89 = vmatpush1.bf16.msra.mxu0 %v71
  %90 = vmatprep.subr.bf16.mxu0 0
  %91 = vmatpush1.bf16.msra.mxu0 %v72
  %92 = vmatprep.subr.bf16.mxu0 0
  %93 = vmatpush1.bf16.msra.mxu0 %v73
  %94 = vmatprep.subr.bf16.mxu0 0
  %95 = vmatpush1.bf16.msra.mxu0 %v74
  %96 = vmatprep.subr.bf16.mxu0 0
  %97 = vmatpush1.bf16.msra.mxu0 %v75
  %98 = vmatprep.subr.bf16.mxu0 0
  %99 = vmatpush1.bf16.msra.mxu0 %v76
  %100 = vmatprep.subr.bf16.mxu0 0
  %101 = vmatpush1.bf16.msra.mxu0 %v77
  %102 = vmatprep.subr.bf16.mxu0 0
  %103 = vmatpush1.bf16.msra.mxu0 0
  %104 = vmatprep.subr.bf16.mxu0 0
  %105 = vmatpush1.bf16.msra.mxu0 0
  %106 = vmatprep.subr.bf16.mxu0 0
  %107 = vmatpush1.bf16.msra.mxu0 0
  %108 = vmatprep.subr.bf16.mxu0 0
  %109 = vmatpush1.bf16.msra.mxu0 0
  %110 = vmatprep.subr.bf16.mxu0 0
  %111 = vmatpush1.bf16.msra.mxu0 0
  %112 = vmatprep.subr.bf16.mxu0 0
  %113 = vmatpush1.bf16.msra.mxu0 0
  %114 = vmatprep.subr.bf16.mxu0 0
  %115 = vmatpush1.bf16.msra.mxu0 0
  %116 = vmatprep.subr.bf16.mxu0 0
  %117 = vmatpush1.bf16.msra.mxu0 0
  %118 = vmatprep.mubr.bf16.mxu0 0
  %119 = vmatmul.mubr.bf16.gmra.mrb[0].mxu0 %v36
  %v120 = vpop.f32.mrb[0].mxu0
  %v121 = vadd.f32 0.0, %v120
  %v122 = vpop.f32.mrb[0].mxu0
  %v123 = vpop.f32.mrb[0].mxu0
  %v124 = vadd.f32 0.0, %v123
  %v125 = vpop.f32.mrb[0].mxu0
  %126 = vdwg.mxu0
  %v127 = vpack.c.bf16 %v124, %v121
  %v129 = vunpack.c.l.b16 %v127
  %v130 = vunpack.c.h.b16 %v127
  %v131 = vpack.c.b16 %v129, %v129
  %v132 = vpack.c.b16 %v130, %v130
  %135 = vst [vmem:[%s2] sm:$0xf] %v131
  %136 = vst [vmem:[%s2 + $0x4] sm:$0xf] %v132
  %v137 = vadd.f32 %v121, %v124
  %v138 = vrot.slane %v137, 4
  %v139 = vadd.f32 %v137, %v138
  %v140 = vrot.slane %v139, 2
  %v141 = vadd.f32 %v139, %v140
  %v142 = vrot.slane %v141, 1
  %v143 = vadd.f32 %v141, %v142
  %v144 = vmul.f32 %v121, %v121
  %v145 = vmul.f32 %v124, %v124
  %v146 = vadd.f32 %v144, %v145
  %v147 = vrot.slane %v146, 4
  %v148 = vadd.f32 %v146, %v147
  %v149 = vrot.slane %v148, 2
  %v150 = vadd.f32 %v148, %v149
  %v151 = vrot.slane %v150, 1
  %v152 = vadd.f32 %v150, %v151
  %vm153 = vcmask 1040384
  %v154 = vsel %vm153, %v143, %v152
  %155 = vst [vmem:[%s3] sm:$0x3] %v154
  // Predicated region
  $region10: #{bottleneck_forward.4} parent=0 // pred_check
    _
  $region11: #{bottleneck_forward.4} parent=0 // pred_check_branch
    %157 = sbr.rel (0) target = $region13
  $region12: #{bottleneck_forward.4} parent=0 // pred_region
    _
  $region13: #{bottleneck_forward.4} parent=0 // pred_fallthru
    _
  // Predicated region
  $region14: #{bottleneck_forward.4} parent=0 // pred_check
    _
  $region15: #{bottleneck_forward.4} parent=0 // pred_check_branch
    %159 = sbr.rel (0) target = $region17
  $region16: #{bottleneck_forward.4} parent=0 // pred_region
    _
  $region17: #{bottleneck_forward.4} parent=0 // pred_fallthru
    _
  // Predicated region
  $region18: #{bottleneck_forward.4} parent=0 // pred_check
    _
  $region19: #{bottleneck_forward.4} parent=0 // pred_check_branch
    %161 = sbr.rel (0) target = $region21
  $region20: #{bottleneck_forward.4} parent=0 // pred_region
    _
  $region21: #{bottleneck_forward.4} parent=0 // pred_fallthru
    _
  // Predicated region
  $region22: #{bottleneck_forward.4} parent=0 // pred_check
    _
  $region23: #{bottleneck_forward.4} parent=0 // pred_check_branch
    %163 = sbr.rel (0) target = $region25
  $region24: #{bottleneck_forward.4} parent=0 // pred_region
    _
  $region25: #{bottleneck_forward.4} parent=0 // pred_fallthru
    _

// kernel: bottleneck_forward.6
$region0: #{bottleneck_forward.6}
  #allocation0 [shape = 'u32[]', space=smem, size = 0x4, offset = 0x4, fixed_abs, tag = 'smem constant byte address 0x4 - core index']
  #allocation1 [shape = 'u32[144,128]{1,0:T(1,128)}', space=vmem, size = 0x12000, scoped, tag = 'internal scratch']
  %s0 = inlined_call_operand.vmem [shape: bf16[16,128], index: 0, kind: input, shape index: {}]
  %s1 = inlined_call_operand.vmem [shape: f32[1,128], index: 1, kind: input, shape index: {}]
  %s2 = inlined_call_operand.vmem [shape: f32[1,128], index: 2, kind: input, shape index: {}]
  %s3 = inlined_call_operand.vmem [shape: bf16[128,128], index: 3, kind: input, shape index: {}]
  %s4 = inlined_call_operand.vmem [shape: bf16[16,128], index: 4, kind: output, shape index: {0}]
  %s5 = inlined_call_operand.vmem [shape: f32[1,2,128], index: 5, kind: output, shape index: {1}]
  %6 = xla_tuple %s4, %s5
  %s7 = sld [smem:[#allocation0]]
  $region34: #{bottleneck_forward.6} parent=0
    _
  %s9 = ssub.s32 1, %s7
  %s10 = scalar_select 0, %s9, %s7
  // Predicated region
  $region2: #{bottleneck_forward.6} parent=0 // pred_check
    _
  $region3: #{bottleneck_forward.6} parent=0 // pred_check_branch
    %12 = sbr.rel (0) target = $region5
  $region4: #{bottleneck_forward.6} parent=0 // pred_region
    _
  $region5: #{bottleneck_forward.6} parent=0 // pred_fallthru
    _
  // Predicated region
  $region6: #{bottleneck_forward.6} parent=0 // pred_check
    _
  $region7: #{bottleneck_forward.6} parent=0 // pred_check_branch
    %14 = sbr.rel (0) target = $region9
  $region8: #{bottleneck_forward.6} parent=0 // pred_region
    _
  $region9: #{bottleneck_forward.6} parent=0 // pred_fallthru
    _
  // Predicated region
  $region10: #{bottleneck_forward.6} parent=0 // pred_check
    _
  $region11: #{bottleneck_forward.6} parent=0 // pred_check_branch
    %16 = sbr.rel (0) target = $region13
  $region12: #{bottleneck_forward.6} parent=0 // pred_region
    _
  $region13: #{bottleneck_forward.6} parent=0 // pred_fallthru
    _
  // Predicated region
  $region14: #{bottleneck_forward.6} parent=0 // pred_check
    _
  $region15: #{bottleneck_forward.6} parent=0 // pred_check_branch
    %18 = sbr.rel (0) target = $region17
  $region16: #{bottleneck_forward.6} parent=0 // pred_region
    _
  $region17: #{bottleneck_forward.6} parent=0 // pred_fallthru
    _
  %v20 = vld [vmem:[%s0] sm:$0xf]
  %v21 = vld [vmem:[%s0 + $0x4] sm:$0xf]
  %v22 = vunpack.c.l.bf16 %v20
  %v23 = vunpack.c.l.bf16 %v21
  %v24 = vld [vmem:[%s1] sm:$0x1]
  %v26 = vlaneseq
  %v27 = vshrl.u32 %v26, 7
  %v28 = vsub.s32 0, %v27
  %v29 = vrot.slane %v24, %v28
  %v31 = vmul.f32 %v22, %v29
  %v32 = vmul.f32 %v23, %v29
  %v33 = vld [vmem:[%s2] sm:$0x1]
  %v35 = vlaneseq
  %v36 = vshrl.u32 %v35, 7
  %v37 = vsub.s32 0, %v36
  %v38 = vrot.slane %v33, %v37
  %v40 = vadd.f32 %v31, %v38
  %v41 = vadd.f32 %v32, %v38
  %v42 = vmax.f32 %v40, 0.0
  %v43 = vmax.f32 %v41, 0.0
  %v44 = vpack.c.bf16 %v43, %v42
  %v45 = vld [vmem:[%s3] sm:$0xf]
  %v46 = vld [vmem:[%s3 + $0x4] sm:$0xf]
  %v47 = vld [vmem:[%s3 + $0x8] sm:$0xf]
  %v48 = vld [vmem:[%s3 + $0xc] sm:$0xf]
  %v49 = vld [vmem:[%s3 + $0x10] sm:$0xf]
  %v50 = vld [vmem:[%s3 + $0x14] sm:$0xf]
  %v51 = vld [vmem:[%s3 + $0x18] sm:$0xf]
  %v52 = vld [vmem:[%s3 + $0x1c] sm:$0xf]
  %v53 = vld [vmem:[%s3 + $0x20] sm:$0xf]
  %v54 = vld [vmem:[%s3 + $0x24] sm:$0xf]
  %v55 = vld [vmem:[%s3 + $0x28] sm:$0xf]
  %v56 = vld [vmem:[%s3 + $0x2c] sm:$0xf]
  %v57 = vld [vmem:[%s3 + $0x30] sm:$0xf]
  %v58 = vld [vmem:[%s3 + $0x34] sm:$0xf]
  %v59 = vld [vmem:[%s3 + $0x38] sm:$0xf]
  %v60 = vld [vmem:[%s3 + $0x3c] sm:$0xf]
  %v77 = vunpack.c.l.b16 %v45
  %v78 = vunpack.c.l.b16 %v46
  %v79 = vunpack.c.l.b16 %v47
  %v80 = vunpack.c.l.b16 %v48
  %v81 = vunpack.c.l.b16 %v49
  %v82 = vunpack.c.l.b16 %v50
  %v83 = vunpack.c.l.b16 %v51
  %v84 = vunpack.c.l.b16 %v52
  %v85 = vunpack.c.l.b16 %v53
  %v86 = vunpack.c.l.b16 %v54
  %v87 = vunpack.c.l.b16 %v55
  %v88 = vunpack.c.l.b16 %v56
  %v89 = vunpack.c.l.b16 %v57
  %v90 = vunpack.c.l.b16 %v58
  %v91 = vunpack.c.l.b16 %v59
  %v92 = vunpack.c.l.b16 %v60
  %v93 = vpack.c.b16 %v78, %v77
  %v94 = vpack.c.b16 %v80, %v79
  %v95 = vpack.c.b16 %v82, %v81
  %v96 = vpack.c.b16 %v84, %v83
  %v97 = vpack.c.b16 %v86, %v85
  %v98 = vpack.c.b16 %v88, %v87
  %v99 = vpack.c.b16 %v90, %v89
  %v100 = vpack.c.b16 %v92, %v91
  %109 = vmatprep.subr.bf16.mxu0 0
  %110 = vmatpush1.bf16.msra.mxu0 %v93
  %111 = vmatprep.subr.bf16.mxu0 0
  %112 = vmatpush1.bf16.msra.mxu0 %v94
  %113 = vmatprep.subr.bf16.mxu0 0
  %114 = vmatpush1.bf16.msra.mxu0 %v95
  %115 = vmatprep.subr.bf16.mxu0 0
  %116 = vmatpush1.bf16.msra.mxu0 %v96
  %117 = vmatprep.subr.bf16.mxu0 0
  %118 = vmatpush1.bf16.msra.mxu0 %v97
  %119 = vmatprep.subr.bf16.mxu0 0
  %120 = vmatpush1.bf16.msra.mxu0 %v98
  %121 = vmatprep.subr.bf16.mxu0 0
  %122 = vmatpush1.bf16.msra.mxu0 %v99
  %123 = vmatprep.subr.bf16.mxu0 0
  %124 = vmatpush1.bf16.msra.mxu0 %v100
  %125 = vmatprep.subr.bf16.mxu0 0
  %126 = vmatpush1.bf16.msra.mxu0 0
  %127 = vmatprep.subr.bf16.mxu0 0
  %128 = vmatpush1.bf16.msra.mxu0 0
  %129 = vmatprep.subr.bf16.mxu0 0
  %130 = vmatpush1.bf16.msra.mxu0 0
  %131 = vmatprep.subr.bf16.mxu0 0
  %132 = vmatpush1.bf16.msra.mxu0 0
  %133 = vmatprep.subr.bf16.mxu0 0
  %134 = vmatpush1.bf16.msra.mxu0 0
  %135 = vmatprep.subr.bf16.mxu0 0
  %136 = vmatpush1.bf16.msra.mxu0 0
  %137 = vmatprep.subr.bf16.mxu0 0
  %138 = vmatpush1.bf16.msra.mxu0 0
  %139 = vmatprep.subr.bf16.mxu0 0
  %140 = vmatpush1.bf16.msra.mxu0 0
  %141 = vmatprep.mubr.bf16.mxu0 0
  %142 = vmatmul.mubr.bf16.gmra.mrb[0].mxu0 %v44
  %v143 = vpop.f32.mrb[0].mxu0
  %v144 = vadd.f32 0.0, %v143
  %v145 = vpop.f32.mrb[0].mxu0
  %v146 = vpop.f32.mrb[0].mxu0
  %v147 = vadd.f32 0.0, %v146
  %v148 = vpop.f32.mrb[0].mxu0
  %149 = vdwg.mxu0
  %v150 = vpack.c.bf16 %v147, %v144
  %v152 = vunpack.c.l.b16 %v150
  %v153 = vunpack.c.h.b16 %v150
  %v154 = vpack.c.b16 %v152, %v152
  %v155 = vpack.c.b16 %v153, %v153
  %158 = vst [vmem:[%s4] sm:$0xf] %v154
  %159 = vst [vmem:[%s4 + $0x4] sm:$0xf] %v155
  %v160 = vadd.f32 %v144, %v147
  %v161 = vrot.slane %v160, 4
  %v162 = vadd.f32 %v160, %v161
  %v163 = vrot.slane %v162, 2
  %v164 = vadd.f32 %v162, %v163
  %v165 = vrot.slane %v164, 1
  %v166 = vadd.f32 %v164, %v165
  %v167 = vmul.f32 %v144, %v144
  %v168 = vmul.f32 %v147, %v147
  %v169 = vadd.f32 %v167, %v168
  %v170 = vrot.slane %v169, 4
  %v171 = vadd.f32 %v169, %v170
  %v172 = vrot.slane %v171, 2
  %v173 = vadd.f32 %v171, %v172
  %v174 = vrot.slane %v173, 1
  %v175 = vadd.f32 %v173, %v174
  %vm176 = vcmask 1040384
  %v177 = vsel %vm176, %v166, %v175
  %178 = vst [vmem:[%s5] sm:$0x3] %v177
  // Predicated region
  $region18: #{bottleneck_forward.6} parent=0 // pred_check
    _
  $region19: #{bottleneck_forward.6} parent=0 // pred_check_branch
    %180 = sbr.rel (0) target = $region21
  $region20: #{bottleneck_forward.6} parent=0 // pred_region
    _
  $region21: #{bottleneck_forward.6} parent=0 // pred_fallthru
    _
  // Predicated region
  $region22: #{bottleneck_forward.6} parent=0 // pred_check
    _
  $region23: #{bottleneck_forward.6} parent=0 // pred_check_branch
    %182 = sbr.rel (0) target = $region25
  $region24: #{bottleneck_forward.6} parent=0 // pred_region
    _
  $region25: #{bottleneck_forward.6} parent=0 // pred_fallthru
    _
  // Predicated region
  $region26: #{bottleneck_forward.6} parent=0 // pred_check
    _
  $region27: #{bottleneck_forward.6} parent=0 // pred_check_branch
    %184 = sbr.rel (0) target = $region29
  $region28: #{bottleneck_forward.6} parent=0 // pred_region
    _
  $region29: #{bottleneck_forward.6} parent=0 // pred_fallthru
    _
  // Predicated region
  $region30: #{bottleneck_forward.6} parent=0 // pred_check
    _
  $region31: #{bottleneck_forward.6} parent=0 // pred_check_branch
    %186 = sbr.rel (0) target = $region33
  $region32: #{bottleneck_forward.6} parent=0 // pred_region
    _
  $region33: #{bottleneck_forward.6} parent=0 // pred_fallthru
    _

// kernel: bottleneck_forward.5
$region0: #{bottleneck_forward.5}
  #allocation0 [shape = 'u32[]', space=smem, size = 0x4, offset = 0x4, fixed_abs, tag = 'smem constant byte address 0x4 - core index']
  #allocation1 [shape = 'u32[144,128]{1,0:T(1,128)}', space=vmem, size = 0x12000, scoped, tag = 'internal scratch']
  %s0 = inlined_call_operand.vmem [shape: bf16[16,128], index: 0, kind: input, shape index: {}]
  %s1 = inlined_call_operand.vmem [shape: f32[1,128], index: 1, kind: input, shape index: {}]
  %s2 = inlined_call_operand.vmem [shape: f32[1,128], index: 2, kind: input, shape index: {}]
  %s3 = inlined_call_operand.vmem [shape: bf16[384,128], index: 3, kind: input, shape index: {}]
  %s4 = inlined_call_operand.vmem [shape: bf16[16,128], index: 4, kind: output, shape index: {0}]
  %s5 = inlined_call_operand.vmem [shape: f32[1,2,128], index: 5, kind: output, shape index: {1}]
  %6 = xla_tuple %s4, %s5
  %s7 = sld [smem:[#allocation0]]
  $region34: #{bottleneck_forward.5} parent=0
    _
  %s9 = ssub.s32 1, %s7
  %s10 = scalar_select 0, %s9, %s7
  // Predicated region
  $region2: #{bottleneck_forward.5} parent=0 // pred_check
    _
  $region3: #{bottleneck_forward.5} parent=0 // pred_check_branch
    %12 = sbr.rel (0) target = $region5
  $region4: #{bottleneck_forward.5} parent=0 // pred_region
    _
  $region5: #{bottleneck_forward.5} parent=0 // pred_fallthru
    _
  // Predicated region
  $region6: #{bottleneck_forward.5} parent=0 // pred_check
    _
  $region7: #{bottleneck_forward.5} parent=0 // pred_check_branch
    %14 = sbr.rel (0) target = $region9
  $region8: #{bottleneck_forward.5} parent=0 // pred_region
    _
  $region9: #{bottleneck_forward.5} parent=0 // pred_fallthru
    _
  // Predicated region
  $region10: #{bottleneck_forward.5} parent=0 // pred_check
    _
  $region11: #{bottleneck_forward.5} parent=0 // pred_check_branch
    %16 = sbr.rel (0) target = $region13
  $region12: #{bottleneck_forward.5} parent=0 // pred_region
    _
  $region13: #{bottleneck_forward.5} parent=0 // pred_fallthru
    _
  // Predicated region
  $region14: #{bottleneck_forward.5} parent=0 // pred_check
    _
  $region15: #{bottleneck_forward.5} parent=0 // pred_check_branch
    %18 = sbr.rel (0) target = $region17
  $region16: #{bottleneck_forward.5} parent=0 // pred_region
    _
  $region17: #{bottleneck_forward.5} parent=0 // pred_fallthru
    _
  %v20 = vld [vmem:[%s0] sm:$0xf]
  %v21 = vld [vmem:[%s0 + $0x4] sm:$0xf]
  %v22 = vunpack.c.l.bf16 %v20
  %v23 = vunpack.c.l.bf16 %v21
  %v24 = vld [vmem:[%s1] sm:$0x1]
  %v26 = vlaneseq
  %v27 = vshrl.u32 %v26, 7
  %v28 = vsub.s32 0, %v27
  %v29 = vrot.slane %v24, %v28
  %v31 = vmul.f32 %v22, %v29
  %v32 = vmul.f32 %v23, %v29
  %v33 = vld [vmem:[%s2] sm:$0x1]
  %v35 = vlaneseq
  %v36 = vshrl.u32 %v35, 7
  %v37 = vsub.s32 0, %v36
  %v38 = vrot.slane %v33, %v37
  %v40 = vadd.f32 %v31, %v38
  %v41 = vadd.f32 %v32, %v38
  %v42 = vmax.f32 %v40, 0.0
  %v43 = vmax.f32 %v41, 0.0
  %v44 = vpack.c.bf16 %v43, %v42
  %v46 = vunpack.c.l.b16 %v44
  %v47 = vunpack.c.h.b16 %v44
  %v48 = vpack.c.b16 %v46, %v46
  %v49 = vpack.c.b16 %v47, %v47
  %v51 = vshrl.u32 %v48, 16
  %v53 = vrot.slane %v51, 7
  %v54 = vshll.u32 %v48, 16
  %v56 = vor.u32 %v53, %v54
  %v58 = vshrl.u32 %v49, 16
  %v60 = vrot.slane %v58, 7
  %v61 = vshll.u32 %v49, 16
  %v63 = vor.u32 %v60, %v61
  %vm66 = vcmask 1040384
  %vm67 = vsmask.f32 256
  %vm68 = vmand %vm66, %vm67
  %v69 = vsel %vm68, 0, %v56
  %v70 = vsel %vm68, 0, %v63
  %v71 = vrot.slane %v54, 1
  %v72 = vor.u32 %v51, %v71
  %v73 = vrot.slane %v61, 1
  %v74 = vor.u32 %v58, %v73
  %vm77 = vcmask 1043456
  %vm78 = vsmask.f32 3328
  %vm79 = vmand %vm77, %vm78
  %v80 = vsel %vm79, %v72, 0
  %v81 = vsel %vm79, %v74, 0
  %v86 = vunpack.c.l.b16 %v69
  %v87 = vunpack.c.l.b16 %v80
  %v88 = vunpack.c.l.b16 %v70
  %v89 = vunpack.c.l.b16 %v81
  %v90 = vld [vmem:[%s3] sm:$0xf]
  %v91 = vld [vmem:[%s3 + $0x4] sm:$0xf]
  %v92 = vld [vmem:[%s3 + $0x8] sm:$0xf]
  %v93 = vld [vmem:[%s3 + $0xc] sm:$0xf]
  %v94 = vld [vmem:[%s3 + $0x10] sm:$0xf]
  %v95 = vld [vmem:[%s3 + $0x14] sm:$0xf]
  %v96 = vld [vmem:[%s3 + $0x18] sm:$0xf]
  %v97 = vld [vmem:[%s3 + $0x1c] sm:$0xf]
  %v98 = vld [vmem:[%s3 + $0x20] sm:$0xf]
  %v99 = vld [vmem:[%s3 + $0x24] sm:$0xf]
  %v100 = vld [vmem:[%s3 + $0x28] sm:$0xf]
  %v101 = vld [vmem:[%s3 + $0x2c] sm:$0xf]
  %v102 = vld [vmem:[%s3 + $0x30] sm:$0xf]
  %v103 = vld [vmem:[%s3 + $0x34] sm:$0xf]
  %v104 = vld [vmem:[%s3 + $0x38] sm:$0xf]
  %v105 = vld [vmem:[%s3 + $0x3c] sm:$0xf]
  %v106 = vld [vmem:[%s3 + $0x40] sm:$0xf]
  %v107 = vld [vmem:[%s3 + $0x44] sm:$0xf]
  %v108 = vld [vmem:[%s3 + $0x48] sm:$0xf]
  %v109 = vld [vmem:[%s3 + $0x4c] sm:$0xf]
  %v110 = vld [vmem:[%s3 + $0x50] sm:$0xf]
  %v111 = vld [vmem:[%s3 + $0x54] sm:$0xf]
  %v112 = vld [vmem:[%s3 + $0x58] sm:$0xf]
  %v113 = vld [vmem:[%s3 + $0x5c] sm:$0xf]
  %v114 = vld [vmem:[%s3 + $0x60] sm:$0xf]
  %v115 = vld [vmem:[%s3 + $0x64] sm:$0xf]
  %v116 = vld [vmem:[%s3 + $0x68] sm:$0xf]
  %v117 = vld [vmem:[%s3 + $0x6c] sm:$0xf]
  %v118 = vld [vmem:[%s3 + $0x70] sm:$0xf]
  %v119 = vld [vmem:[%s3 + $0x74] sm:$0xf]
  %v120 = vld [vmem:[%s3 + $0x78] sm:$0xf]
  %v121 = vld [vmem:[%s3 + $0x7c] sm:$0xf]
  %v122 = vld [vmem:[%s3 + $0x80] sm:$0xf]
  %v123 = vld [vmem:[%s3 + $0x84] sm:$0xf]
  %v124 = vld [vmem:[%s3 + $0x88] sm:$0xf]
  %v125 = vld [vmem:[%s3 + $0x8c] sm:$0xf]
  %v126 = vld [vmem:[%s3 + $0x90] sm:$0xf]
  %v127 = vld [vmem:[%s3 + $0x94] sm:$0xf]
  %v128 = vld [vmem:[%s3 + $0x98] sm:$0xf]
  %v129 = vld [vmem:[%s3 + $0x9c] sm:$0xf]
  %v130 = vld [vmem:[%s3 + $0xa0] sm:$0xf]
  %v131 = vld [vmem:[%s3 + $0xa4] sm:$0xf]
  %v132 = vld [vmem:[%s3 + $0xa8] sm:$0xf]
  %v133 = vld [vmem:[%s3 + $0xac] sm:$0xf]
  %v134 = vld [vmem:[%s3 + $0xb0] sm:$0xf]
  %v135 = vld [vmem:[%s3 + $0xb4] sm:$0xf]
  %v136 = vld [vmem:[%s3 + $0xb8] sm:$0xf]
  %v137 = vld [vmem:[%s3 + $0xbc] sm:$0xf]
  %v138 = vpack.c.b16 %v88, %v86
  %v139 = vpack.c.b16 %v47, %v46
  %v140 = vpack.c.b16 %v89, %v87
  %v192 = vunpack.c.l.b16 %v90
  %v193 = vunpack.c.l.b16 %v91
  %v194 = vunpack.c.l.b16 %v92
  %v195 = vunpack.c.l.b16 %v93
  %v196 = vunpack.c.l.b16 %v94
  %v197 = vunpack.c.l.b16 %v95
  %v198 = vunpack.c.l.b16 %v96
  %v199 = vunpack.c.l.b16 %v97
  %v200 = vunpack.c.l.b16 %v98
  %v201 = vunpack.c.l.b16 %v99
  %v202 = vunpack.c.l.b16 %v100
  %v203 = vunpack.c.l.b16 %v101
  %v204 = vunpack.c.l.b16 %v102
  %v205 = vunpack.c.l.b16 %v103
  %v206 = vunpack.c.l.b16 %v104
  %v207 = vunpack.c.l.b16 %v105
  %v208 = vunpack.c.l.b16 %v106
  %v209 = vunpack.c.l.b16 %v107
  %v210 = vunpack.c.l.b16 %v108
  %v211 = vunpack.c.l.b16 %v109
  %v212 = vunpack.c.l.b16 %v110
  %v213 = vunpack.c.l.b16 %v111
  %v214 = vunpack.c.l.b16 %v112
  %v215 = vunpack.c.l.b16 %v113
  %v216 = vunpack.c.l.b16 %v114
  %v217 = vunpack.c.l.b16 %v115
  %v218 = vunpack.c.l.b16 %v116
  %v219 = vunpack.c.l.b16 %v117
  %v220 = vunpack.c.l.b16 %v118
  %v221 = vunpack.c.l.b16 %v119
  %v222 = vunpack.c.l.b16 %v120
  %v223 = vunpack.c.l.b16 %v121
  %v224 = vunpack.c.l.b16 %v122
  %v225 = vunpack.c.l.b16 %v123
  %v226 = vunpack.c.l.b16 %v124
  %v227 = vunpack.c.l.b16 %v125
  %v228 = vunpack.c.l.b16 %v126
  %v229 = vunpack.c.l.b16 %v127
  %v230 = vunpack.c.l.b16 %v128
  %v231 = vunpack.c.l.b16 %v129
  %v232 = vunpack.c.l.b16 %v130
  %v233 = vunpack.c.l.b16 %v131
  %v234 = vunpack.c.l.b16 %v132
  %v235 = vunpack.c.l.b16 %v133
  %v236 = vunpack.c.l.b16 %v134
  %v237 = vunpack.c.l.b16 %v135
  %v238 = vunpack.c.l.b16 %v136
  %v239 = vunpack.c.l.b16 %v137
  %v240 = vpack.c.b16 %v193, %v192
  %v241 = vpack.c.b16 %v195, %v194
  %v242 = vpack.c.b16 %v197, %v196
  %v243 = vpack.c.b16 %v199, %v198
  %v244 = vpack.c.b16 %v201, %v200
  %v245 = vpack.c.b16 %v203, %v202
  %v246 = vpack.c.b16 %v205, %v204
  %v247 = vpack.c.b16 %v207, %v206
  %v248 = vpack.c.b16 %v209, %v208
  %v249 = vpack.c.b16 %v211, %v210
  %v250 = vpack.c.b16 %v213, %v212
  %v251 = vpack.c.b16 %v215, %v214
  %v252 = vpack.c.b16 %v217, %v216
  %v253 = vpack.c.b16 %v219, %v218
  %v254 = vpack.c.b16 %v221, %v220
  %v255 = vpack.c.b16 %v223, %v222
  %v256 = vpack.c.b16 %v225, %v224
  %v257 = vpack.c.b16 %v227, %v226
  %v258 = vpack.c.b16 %v229, %v228
  %v259 = vpack.c.b16 %v231, %v230
  %v260 = vpack.c.b16 %v233, %v232
  %v261 = vpack.c.b16 %v235, %v234
  %v262 = vpack.c.b16 %v237, %v236
  %v263 = vpack.c.b16 %v239, %v238
  %288 = vmatprep.subr.bf16.mxu0 0
  %289 = vmatpush1.bf16.msra.mxu0 %v240
  %290 = vmatprep.subr.bf16.mxu0 0
  %291 = vmatpush1.bf16.msra.mxu0 %v241
  %292 = vmatprep.subr.bf16.mxu0 0
  %293 = vmatpush1.bf16.msra.mxu0 %v242
  %294 = vmatprep.subr.bf16.mxu0 0
  %295 = vmatpush1.bf16.msra.mxu0 %v243
  %296 = vmatprep.subr.bf16.mxu0 0
  %297 = vmatpush1.bf16.msra.mxu0 %v244
  %298 = vmatprep.subr.bf16.mxu0 0
  %299 = vmatpush1.bf16.msra.mxu0 %v245
  %300 = vmatprep.subr.bf16.mxu0 0
  %301 = vmatpush1.bf16.msra.mxu0 %v246
  %302 = vmatprep.subr.bf16.mxu0 0
  %303 = vmatpush1.bf16.msra.mxu0 %v247
  %304 = vmatprep.subr.bf16.mxu0 0
  %305 = vmatpush1.bf16.msra.mxu0 %v248
  %306 = vmatprep.subr.bf16.mxu0 0
  %307 = vmatpush1.bf16.msra.mxu0 %v249
  %308 = vmatprep.subr.bf16.mxu0 0
  %309 = vmatpush1.bf16.msra.mxu0 %v250
  %310 = vmatprep.subr.bf16.mxu0 0
  %311 = vmatpush1.bf16.msra.mxu0 %v251
  %312 = vmatprep.subr.bf16.mxu0 0
  %313 = vmatpush1.bf16.msra.mxu0 %v252
  %314 = vmatprep.subr.bf16.mxu0 0
  %315 = vmatpush1.bf16.msra.mxu0 %v253
  %316 = vmatprep.subr.bf16.mxu0 0
  %317 = vmatpush1.bf16.msra.mxu0 %v254
  %318 = vmatprep.subr.bf16.mxu0 0
  %319 = vmatpush1.bf16.msra.mxu0 %v255
  %320 = vmatprep.mubr.bf16.mxu0 %v139
  %321 = vmatmul.mubr.bf16.gmra.mrb[0].mxu0 %v138
  %v322 = vpop.f32.mrb[0].mxu0
  %v323 = vadd.f32 0.0, %v322
  %v324 = vpop.f32.mrb[0].mxu0
  %v325 = vpop.f32.mrb[0].mxu0
  %v326 = vadd.f32 0.0, %v325
  %v327 = vpop.f32.mrb[0].mxu0
  %328 = vdwg.mxu0
  %329 = vmatprep.subr.bf16.mxu0 0
  %330 = vmatpush1.bf16.msra.mxu0 %v256
  %331 = vmatprep.subr.bf16.mxu0 0
  %332 = vmatpush1.bf16.msra.mxu0 %v257
  %333 = vmatprep.subr.bf16.mxu0 0
  %334 = vmatpush1.bf16.msra.mxu0 %v258
  %335 = vmatprep.subr.bf16.mxu0 0
  %336 = vmatpush1.bf16.msra.mxu0 %v259
  %337 = vmatprep.subr.bf16.mxu0 0
  %338 = vmatpush1.bf16.msra.mxu0 %v260
  %339 = vmatprep.subr.bf16.mxu0 0
  %340 = vmatpush1.bf16.msra.mxu0 %v261
  %341 = vmatprep.subr.bf16.mxu0 0
  %342 = vmatpush1.bf16.msra.mxu0 %v262
  %343 = vmatprep.subr.bf16.mxu0 0
  %344 = vmatpush1.bf16.msra.mxu0 %v263
  %345 = vmatprep.subr.bf16.mxu0 0
  %346 = vmatpush1.bf16.msra.mxu0 0
  %347 = vmatprep.subr.bf16.mxu0 0
  %348 = vmatpush1.bf16.msra.mxu0 0
  %349 = vmatprep.subr.bf16.mxu0 0
  %350 = vmatpush1.bf16.msra.mxu0 0
  %351 = vmatprep.subr.bf16.mxu0 0
  %352 = vmatpush1.bf16.msra.mxu0 0
  %353 = vmatprep.subr.bf16.mxu0 0
  %354 = vmatpush1.bf16.msra.mxu0 0
  %355 = vmatprep.subr.bf16.mxu0 0
  %356 = vmatpush1.bf16.msra.mxu0 0
  %357 = vmatprep.subr.bf16.mxu0 0
  %358 = vmatpush1.bf16.msra.mxu0 0
  %359 = vmatprep.subr.bf16.mxu0 0
  %360 = vmatpush1.bf16.msra.mxu0 0
  %361 = vmatprep.mubr.bf16.mxu0 0
  %362 = vmatmul.mubr.bf16.gmra.mrb[0].mxu0 %v140
  %v363 = vpop.f32.mrb[0].mxu0
  %v364 = vadd.f32 %v323, %v363
  %v365 = vpop.f32.mrb[0].mxu0
  %v366 = vpop.f32.mrb[0].mxu0
  %v367 = vadd.f32 %v326, %v366
  %v368 = vpop.f32.mrb[0].mxu0
  %369 = vdwg.mxu0
  %v370 = vpack.c.bf16 %v367, %v364
  %v372 = vunpack.c.l.b16 %v370
  %v373 = vunpack.c.h.b16 %v370
  %v374 = vpack.c.b16 %v372, %v372
  %v375 = vpack.c.b16 %v373, %v373
  %378 = vst [vmem:[%s4] sm:$0xf] %v374
  %379 = vst [vmem:[%s4 + $0x4] sm:$0xf] %v375
  %v380 = vadd.f32 %v364, %v367
  %v381 = vrot.slane %v380, 4
  %v382 = vadd.f32 %v380, %v381
  %v383 = vrot.slane %v382, 2
  %v384 = vadd.f32 %v382, %v383
  %v385 = vrot.slane %v384, 1
  %v386 = vadd.f32 %v384, %v385
  %v387 = vmul.f32 %v364, %v364
  %v388 = vmul.f32 %v367, %v367
  %v389 = vadd.f32 %v387, %v388
  %v390 = vrot.slane %v389, 4
  %v391 = vadd.f32 %v389, %v390
  %v392 = vrot.slane %v391, 2
  %v393 = vadd.f32 %v391, %v392
  %v394 = vrot.slane %v393, 1
  %v395 = vadd.f32 %v393, %v394
  %vm396 = vcmask 1040384
  %v397 = vsel %vm396, %v386, %v395
  %398 = vst [vmem:[%s5] sm:$0x3] %v397
  // Predicated region
  $region18: #{bottleneck_forward.5} parent=0 // pred_check
    _
  $region19: #{bottleneck_forward.5} parent=0 // pred_check_branch
    %400 = sbr.rel (0) target = $region21
  $region20: #{bottleneck_forward.5} parent=0 // pred_region
    _
  $region21: #{bottleneck_forward.5} parent=0 // pred_fallthru
    _
  // Predicated region
  $region22: #{bottleneck_forward.5} parent=0 // pred_check
    _
  $region23: #{bottleneck_forward.5} parent=0 // pred_check_branch
    %402 = sbr.rel (0) target = $region25
  $region24: #{bottleneck_forward.5} parent=0 // pred_region
    _
  $region25: #{bottleneck_forward.5} parent=0 // pred_fallthru
    _
  // Predicated region
  $region26: #{bottleneck_forward.5} parent=0 // pred_check
    _
  $region27: #{bottleneck_forward.5} parent=0 // pred_check_branch
    %404 = sbr.rel (0) target = $region29
  $region28: #{bottleneck_forward.5} parent=0 // pred_region
    _
  $region29: #{bottleneck_forward.5} parent=0 // pred_fallthru
    _
  // Predicated region
  $region30: #{bottleneck_forward.5} parent=0 // pred_check
    _
  $region31: #{bottleneck_forward.5} parent=0 // pred_check_branch
    %406 = sbr.rel (0) target = $region33
  $region32: #{bottleneck_forward.5} parent=0 // pred_region
    _
  $region33: #{bottleneck_forward.5} parent=0 // pred_fallthru
    _

</llo_original>
